<compile_context>
chip_gen: v7x
topology: tpu7x:2x2x1
jax: 0.10.0
libtpu: 0.0.40
codegen_flags: <defaults>
</compile_context>

<pallas_src>
import functools

import jax
import jax.numpy as jnp
from jax.experimental import pallas as pl
from jax.experimental.pallas import tpu as pltpu

_INV_SQRT2 = 0.7071067811865476  # 1/sqrt(2), Python float constant


def _round_up(x, m):
    return ((x + m - 1) // m) * m


def _vmem_capacity_bytes():
    """Per-core VMEM capacity; conservative 64 MiB (v7x) fallback."""
    try:
        return int(pltpu.get_tpu_info().vmem_capacity_bytes)
    except Exception:
        return 64 << 20


def _gelu_erf_f32(h):
    # exact GELU (erf form, matches torch.nn.GELU default), f32 math
    return 0.5 * h * (1.0 + jax.lax.erf(h * _INV_SQRT2))


# ---------------------------------------------------------------------------
# Kernels
# ---------------------------------------------------------------------------
def _mlp_kernel_resident(x_ref, w1_ref, b1_ref, w2_ref, b2_ref, o_ref):
    """Whole W1/W2 resident in VMEM; one row-tile per grid step."""
    h = jnp.dot(x_ref[...], w1_ref[...], preferred_element_type=jnp.float32)
    h = _gelu_erf_f32(h + b1_ref[...])                 # f32 bias + GELU
    # dropout p=0.0 / eval == identity
    out = jnp.dot(h.astype(w2_ref.dtype), w2_ref[...],
                  preferred_element_type=jnp.float32)
    o_ref[...] = (out + b2_ref[...]).astype(o_ref.dtype)


def _mlp_kernel_hblock(x_ref, w1_ref, b1_ref, w2_ref, b2_ref, o_ref, acc_ref):
    """Hidden-axis blocked: accumulate partial fc2 results in f32 scratch."""
    k = pl.program_id(1)

    @pl.when(k == 0)
    def _():
        acc_ref[...] = jnp.zeros_like(acc_ref)

    h = jnp.dot(x_ref[...], w1_ref[...], preferred_element_type=jnp.float32)
    h = _gelu_erf_f32(h + b1_ref[...])
    acc_ref[...] += jnp.dot(h.astype(w2_ref.dtype), w2_ref[...],
                            preferred_element_type=jnp.float32)

    @pl.when(k == pl.num_programs(1) - 1)
    def _():
        o_ref[...] = (acc_ref[...] + b2_ref[...]).astype(o_ref.dtype)


# ---------------------------------------------------------------------------
# One-time parameter preparation (padding + optional bf16 cast, hoisted out of
# the per-call forward path).
# ---------------------------------------------------------------------------
def prepare_mlp3d_params(w1, b1, w2, b2, *, use_bf16_matmul=False):
    in_features, hidden = w1.shape
    assert w2.shape[0] == hidden
    out_features = w2.shape[1]

    in_p = _round_up(in_features, 128)
    hid_p = _round_up(hidden, 128)
    out_p = _round_up(out_features, 128)

    wdt = jnp.bfloat16 if use_bf16_matmul else jnp.float32
    # Zero padding is exact for this MLP (padded rows/cols contribute 0,
    # GELU(0) == 0), so results on the original slice are unchanged.
    w1_p = jnp.pad(w1, ((0, in_p - in_features), (0, hid_p - hidden))).astype(wdt)
    w2_p = jnp.pad(w2, ((0, hid_p - hidden), (0, out_p - out_features))).astype(wdt)
    b1_p = jnp.pad(b1, (0, hid_p - hidden)).astype(jnp.float32).reshape(1, hid_p)
    b2_p = jnp.pad(b2, (0, out_p - out_features)).astype(jnp.float32).reshape(1, out_p)
    return {"w1": w1_p, "b1": b1_p, "w2": w2_p, "b2": b2_p}


# ---------------------------------------------------------------------------
# Forward
# ---------------------------------------------------------------------------
@functools.partial(jax.jit,
                   static_argnames=("out_features", "force_hblock", "tk_hint"))
def mlp3d_pallas_forward(x, w1_p, b1_p, w2_p, b2_p, *, out_features,
                         force_hblock=False, tk_hint=512):
    """x: (..., in_features) -> (..., out_features).  Params from
    prepare_mlp3d_params (feature dims pre-padded to multiples of 128)."""
    in_features = x.shape[-1]
    in_p, hid_p = w1_p.shape
    out_p = w2_p.shape[1]
    lead = x.shape[:-1]

    x2d = x.reshape(-1, in_features)
    m = x2d.shape[0]

    wdt = w1_p.dtype
    w_isz = w1_p.dtype.itemsize
    x_isz = 2 if wdt == jnp.bfloat16 else x.dtype.itemsize
    o_isz = x.dtype.itemsize

    vmem_cap = _vmem_capacity_bytes()
    usable = int(vmem_cap * 0.9)          # ~10% headroom below physical VMEM

    weight_bytes = (in_p * hid_p + hid_p * out_p) * w_isz + 4 * (hid_p + out_p)
    use_hblock = bool(force_hblock) or (weight_bytes > int(0.55 * vmem_cap))

    # ---- hidden-block size (only used by the blocked path): a multiple of
    # 128 that divides hid_p exactly (no re-padding of the hidden axis).
    g = hid_p // 128
    d = 1
    for cand in range(min(g, max(1, tk_hint // 128)), 0, -1):
        if g % cand == 0:
            d = cand
            break
    tk = 128 * d

    # ---- VMEM requirement models (bytes) for a given row tile -------------
    def _resident_need(tm):
        return (2 * tm * in_p * x_isz          # x tile, double-buffered
                + 2 * tm * out_p * o_isz       # out tile, double-buffered
                + weight_bytes                 # resident W1/W2/biases
                + tm * hid_p * 4               # f32 GELU intermediate
                + tm * out_p * 4)              # f32 accumulator before cast

    def _hblock_need(tm):
        return (2 * tm * in_p * x_isz
                + 2 * tm * out_p * o_isz
                + 2 * in_p * tk * w_isz        # W1 column block, double-buffered
                + 2 * tk * out_p * w_isz       # W2 row block, double-buffered
                + 2 * (tk + out_p) * 4         # bias blocks
                + tm * tk * 4                  # f32 GELU intermediate
                + tm * out_p * 4)              # f32 accumulator scratch

    need_fn = _hblock_need if use_hblock else _resident_need

    # ---- adaptive row tile: largest that fits VMEM and bounds M padding ----
    m8 = max(8, _round_up(m, 8))
    tm_eff = 8
    for tm in (512, 256, 128, 64, 32, 16, 8):
        t = max(8, min(tm, m8))
        m_p_cand = _round_up(m, t)
        waste_ok = (m_p_cand - m) <= max(m // 8, m8 - m)
        if need_fn(t) <= usable and waste_ok:
            tm_eff = t
            break
    m_p = _round_up(m, tm_eff)

    # ---- pad rows (and lane-pad features) of the activations ---------------
    x_p = jnp.pad(x2d, ((0, m_p - m), (0, in_p - in_features))).astype(wdt)

    vmem_request = need_fn(tm_eff)
    vmem_limit = min(max(vmem_request * 3 // 2 + (4 << 20), 32 << 20), usable)

    flops = 2 * m_p * (in_p * hid_p + hid_p * out_p)
    bytes_accessed = (m_p * in_p * x_isz + in_p * hid_p * w_isz
                      + hid_p * out_p * w_isz + 4 * (hid_p + out_p)
                      + m_p * out_p * o_isz)
    cost = pl.CostEstimate(flops=flops, transcendentals=m_p * hid_p,
                           bytes_accessed=bytes_accessed)

    if not use_hblock:
        out2d = pl.pallas_call(
            _mlp_kernel_resident,
            out_shape=jax.ShapeDtypeStruct((m_p, out_p), x.dtype),
            grid_spec=pltpu.PrefetchScalarGridSpec(
                num_scalar_prefetch=0,
                grid=(m_p // tm_eff,),
                in_specs=[
                    # Row tile of activations: pipelined over the grid.
                    pl.BlockSpec((tm_eff, in_p), lambda i: (i, 0)),
                    # Weights / biases: whole arrays resident in VMEM for the
                    # full kernel (no per-step windowing, no double buffering).
                    pl.BlockSpec(memory_space=pltpu.MemorySpace.VMEM),
                    pl.BlockSpec(memory_space=pltpu.MemorySpace.VMEM),
                    pl.BlockSpec(memory_space=pltpu.MemorySpace.VMEM),
                    pl.BlockSpec(memory_space=pltpu.MemorySpace.VMEM),
                ],
                out_specs=pl.BlockSpec((tm_eff, out_p), lambda i: (i, 0)),
            ),
            compiler_params=pltpu.CompilerParams(
                dimension_semantics=("parallel",),
                vmem_limit_bytes=int(vmem_limit),
            ),
            cost_estimate=cost,
        )(x_p, w1_p, b1_p, w2_p, b2_p)
    else:
        n_k = hid_p // tk
        out2d = pl.pallas_call(
            _mlp_kernel_hblock,
            out_shape=jax.ShapeDtypeStruct((m_p, out_p), x.dtype),
            grid_spec=pltpu.PrefetchScalarGridSpec(
                num_scalar_prefetch=0,
                grid=(m_p // tm_eff, n_k),
                in_specs=[
                    pl.BlockSpec((tm_eff, in_p), lambda i, k: (i, 0)),
                    pl.BlockSpec((in_p, tk), lambda i, k: (0, k)),
                    pl.BlockSpec((1, tk), lambda i, k: (0, k)),
                    pl.BlockSpec((tk, out_p), lambda i, k: (k, 0)),
                    pl.BlockSpec((1, out_p), lambda i, k: (0, 0)),
                ],
                out_specs=pl.BlockSpec((tm_eff, out_p), lambda i, k: (i, 0)),
                scratch_shapes=[pltpu.VMEM((tm_eff, out_p), jnp.float32)],
            ),
            compiler_params=pltpu.CompilerParams(
                dimension_semantics=("parallel", "arbitrary"),
                vmem_limit_bytes=int(vmem_limit),
            ),
            cost_estimate=cost,
        )(x_p, w1_p, b1_p, w2_p, b2_p)

    out2d = out2d[:m, :out_features]
    return out2d.reshape(*lead, out_features)


def _reference_mlp(x, w1, b1, w2, b2):
    h = jnp.dot(x, w1) + b1
    h = _gelu_erf_f32(h)
    return jnp.dot(h, w2) + b2


if __name__ == "__main__":
    # Small shapes consistent with the ViT MLP: (batch, tokens, in_features)
    batch, tokens = 2, 8
    in_features, hidden_features, out_features = 32, 64, 32

    key = jax.random.PRNGKey(0)
    kx, k1, kb1, k2, kb2 = jax.random.split(key, 5)

    x = jax.random.normal(kx, (batch, tokens, in_features), dtype=jnp.float32)
    # deterministic synthetic parameters (not a checkpoint load)
    w1 = jax.random.normal(k1, (in_features, hidden_features), jnp.float32) * 0.05
    b1 = jax.random.normal(kb1, (hidden_features,), jnp.float32) * 0.01
    w2 = jax.random.normal(k2, (hidden_features, out_features), jnp.float32) * 0.05
    b2 = jax.random.normal(kb2, (out_features,), jnp.float32) * 0.01

    ref = _reference_mlp(x, w1, b1, w2, b2)

    # 1) f32 resident-weight path
    p32 = prepare_mlp3d_params(w1, b1, w2, b2, use_bf16_matmul=False)
    out = mlp3d_pallas_forward(x, p32["w1"], p32["b1"], p32["w2"], p32["b2"],
                               out_features=out_features)
    out = jax.block_until_ready(out)
    assert out.shape == (batch, tokens, out_features)
    assert jnp.allclose(out, ref, atol=1e-4, rtol=1e-4), "f32 path mismatch"

    # 2) bf16 MXU operands, f32 accumulation / bias / GELU
    pbf = prepare_mlp3d_params(w1, b1, w2, b2, use_bf16_matmul=True)
    out_bf = mlp3d_pallas_forward(x, pbf["w1"], pbf["b1"], pbf["w2"], pbf["b2"],
                                  out_features=out_features)
    out_bf = jax.block_until_ready(out_bf)
    assert jnp.allclose(out_bf, ref, atol=3e-2, rtol=3e-2), "bf16 path mismatch"

    # 3) hidden-axis-blocked accumulator path (as used when weights don't fit
    #    VMEM, e.g. ViT-L/H widths on v7x); force it here at small shapes with
    #    two hidden blocks to exercise init/accumulate/writeback.
    in2, hid2, out2 = 128, 256, 128
    k2b = jax.random.PRNGKey(1)
    kx2, kw1, kbb1, kw2, kbb2 = jax.random.split(k2b, 5)
    x2 = jax.random.normal(kx2, (batch, tokens, in2), jnp.float32)
    w1b = jax.random.normal(kw1, (in2, hid2), jnp.float32) * 0.05
    b1b = jax.random.normal(kbb1, (hid2,), jnp.float32) * 0.01
    w2b = jax.random.normal(kw2, (hid2, out2), jnp.float32) * 0.05
    b2b = jax.random.normal(kbb2, (out2,), jnp.float32) * 0.01

    p2 = prepare_mlp3d_params(w1b, b1b, w2b, b2b)
    out_blk = mlp3d_pallas_forward(x2, p2["w1"], p2["b1"], p2["w2"], p2["b2"],
                                   out_features=out2, force_hblock=True,
                                   tk_hint=128)
    out_blk = jax.block_until_ready(out_blk)
    ref2 = _reference_mlp(x2, w1b, b1b, w2b, b2b)
    assert out_blk.shape == (batch, tokens, out2)
    assert jnp.allclose(out_blk, ref2, atol=1e-4, rtol=1e-4), "hblock mismatch"

    print("KERNEL_OK")
</pallas_src>

<mosaic_0001>
module attributes {stable_mosaic.version = 11 : i64} {
  func.func @_mlp_kernel_resident(%arg0: i32, %arg1: memref<16x128xf32, #tpu.memory_space<vmem>>, %arg2: memref<128x128xf32, #tpu.memory_space<vmem>>, %arg3: memref<1x128xf32, #tpu.memory_space<vmem>>, %arg4: memref<128x128xf32, #tpu.memory_space<vmem>>, %arg5: memref<1x128xf32, #tpu.memory_space<vmem>>, %arg6: memref<16x128xf32, #tpu.memory_space<vmem>>) attributes {dimension_semantics = [#tpu.dimension_semantics<parallel>], iteration_bounds = array<i64: 1>, scalar_prefetch = 0 : i64, scratch_operands = 0 : i64, tpu.core_type = #tpu.core_type<tc>, window_params = [{transform_indices = @transform_0, window_bounds = array<i64: 16, 128>}, {pipeline_mode = #tpu.pipeline_mode<synchronous>, transform_indices = @transform_1, window_bounds = array<i64: 128, 128>}, {pipeline_mode = #tpu.pipeline_mode<synchronous>, transform_indices = @transform_2, window_bounds = array<i64: 1, 128>}, {pipeline_mode = #tpu.pipeline_mode<synchronous>, transform_indices = @transform_3, window_bounds = array<i64: 128, 128>}, {pipeline_mode = #tpu.pipeline_mode<synchronous>, transform_indices = @transform_4, window_bounds = array<i64: 1, 128>}, {transform_indices = @transform_5, window_bounds = array<i64: 16, 128>}]} {
    %c0 = arith.constant 0 : index
    %c0_0 = arith.constant 0 : index
    %0 = vector.load %arg1[%c0, %c0_0] : memref<16x128xf32, #tpu.memory_space<vmem>>, vector<16x128xf32>
    %c0_1 = arith.constant 0 : index
    %c0_2 = arith.constant 0 : index
    %1 = vector.load %arg2[%c0_1, %c0_2] : memref<128x128xf32, #tpu.memory_space<vmem>>, vector<128x128xf32>
    %cst = arith.constant dense<0.000000e+00> : vector<16x128xf32>
    %2 = tpu.matmul %0, %1, %cst {dimension_numbers = #tpu.dot_dimension_numbers<[1], [0], [0], [1], [0, 0, 1, 1], [], []>} : vector<16x128xf32>, vector<128x128xf32>, vector<16x128xf32> -> vector<16x128xf32>
    %c0_3 = arith.constant 0 : index
    %c0_4 = arith.constant 0 : index
    %3 = vector.load %arg3[%c0_3, %c0_4] : memref<1x128xf32, #tpu.memory_space<vmem>>, vector<1x128xf32>
    %4 = vector.broadcast %3 : vector<1x128xf32> to vector<16x128xf32>
    %5 = arith.addf %2, %4 : vector<16x128xf32>
    %cst_5 = arith.constant 5.000000e-01 : f32
    %6 = vector.broadcast %cst_5 : f32 to vector<16x128xf32>
    %7 = arith.mulf %6, %5 : vector<16x128xf32>
    %cst_6 = arith.constant 0.707106769 : f32
    %8 = vector.broadcast %cst_6 : f32 to vector<16x128xf32>
    %9 = arith.mulf %5, %8 : vector<16x128xf32>
    %10 = math.erf %9 : vector<16x128xf32>
    %cst_7 = arith.constant 1.000000e+00 : f32
    %11 = vector.broadcast %cst_7 : f32 to vector<16x128xf32>
    %12 = arith.addf %11, %10 : vector<16x128xf32>
    %13 = arith.mulf %7, %12 : vector<16x128xf32>
    %c0_8 = arith.constant 0 : index
    %c0_9 = arith.constant 0 : index
    %14 = vector.load %arg4[%c0_8, %c0_9] : memref<128x128xf32, #tpu.memory_space<vmem>>, vector<128x128xf32>
    %cst_10 = arith.constant dense<0.000000e+00> : vector<16x128xf32>
    %15 = tpu.matmul %13, %14, %cst_10 {dimension_numbers = #tpu.dot_dimension_numbers<[1], [0], [0], [1], [0, 0, 1, 1], [], []>} : vector<16x128xf32>, vector<128x128xf32>, vector<16x128xf32> -> vector<16x128xf32>
    %c0_11 = arith.constant 0 : index
    %c0_12 = arith.constant 0 : index
    %16 = vector.load %arg5[%c0_11, %c0_12] : memref<1x128xf32, #tpu.memory_space<vmem>>, vector<1x128xf32>
    %17 = vector.broadcast %16 : vector<1x128xf32> to vector<16x128xf32>
    %18 = arith.addf %15, %17 : vector<16x128xf32>
    %c0_13 = arith.constant 0 : index
    %c0_14 = arith.constant 0 : index
    %19 = vector.load %arg6[%c0_13, %c0_14] : memref<16x128xf32, #tpu.memory_space<vmem>>, vector<16x128xf32>
    tpu.vector_store %arg6[%c0_13, %c0_14], %18 {strides = array<i32>} : memref<16x128xf32, #tpu.memory_space<vmem>>, vector<16x128xf32>,
    return
  }
  func.func @transform_0(%arg0: i32) -> (i32, i32) {
    %c0_i32 = arith.constant 0 : i32
    %c0_i32_0 = arith.constant 0 : i32
    return %arg0, %c0_i32 : i32, i32
  }
  func.func @transform_1(%arg0: i32) -> (i32, i32) {
    %c0_i32 = arith.constant 0 : i32
    %c0_i32_0 = arith.constant 0 : i32
    %c0_i32_1 = arith.constant 0 : i32
    return %c0_i32, %c0_i32_0 : i32, i32
  }
  func.func @transform_2(%arg0: i32) -> (i32, i32) {
    %c0_i32 = arith.constant 0 : i32
    %c0_i32_0 = arith.constant 0 : i32
    %c0_i32_1 = arith.constant 0 : i32
    return %c0_i32, %c0_i32_0 : i32, i32
  }
  func.func @transform_3(%arg0: i32) -> (i32, i32) {
    %c0_i32 = arith.constant 0 : i32
    %c0_i32_0 = arith.constant 0 : i32
    %c0_i32_1 = arith.constant 0 : i32
    return %c0_i32, %c0_i32_0 : i32, i32
  }
  func.func @transform_4(%arg0: i32) -> (i32, i32) {
    %c0_i32 = arith.constant 0 : i32
    %c0_i32_0 = arith.constant 0 : i32
    %c0_i32_1 = arith.constant 0 : i32
    return %c0_i32, %c0_i32_0 : i32, i32
  }
  func.func @transform_5(%arg0: i32) -> (i32, i32) {
    %c0_i32 = arith.constant 0 : i32
    %c0_i32_0 = arith.constant 0 : i32
    return %arg0, %c0_i32 : i32, i32
  }
}

</mosaic_0001>

<llo_original>
// kernel: mlp3d_pallas_forward.1
$region0: #{mlp3d_pallas_forward.1}
  #allocation0 [shape = 'u32[]', space=smem, size = 0x4, offset = 0x4, fixed_abs, tag = 'smem constant byte address 0x4 - core index']
  #allocation1 [shape = 'u32[144,128]{1,0:T(1,128)}', space=vmem, size = 0x12000, scoped, tag = 'internal scratch']
  %s0 = inlined_call_operand.vmem [shape: f32[16,128], index: 0, kind: input, shape index: {}]
  %s1 = inlined_call_operand.hbm [shape: f32[128,128], index: 1, kind: input, shape index: {}]
  %s2 = inlined_call_operand.vmem [shape: f32[1,128], index: 2, kind: input, shape index: {}]
  %s3 = inlined_call_operand.hbm [shape: f32[128,128], index: 3, kind: input, shape index: {}]
  %s4 = inlined_call_operand.vmem [shape: f32[1,128], index: 4, kind: input, shape index: {}]
  %s5 = inlined_call_operand.vmem [shape: f32[16,128], index: 5, kind: output, shape index: {}]
  %s6 = sld [smem:[#allocation0]]
  $region38: #{mlp3d_pallas_forward.1} parent=0
    _
  %s8 = ssub.s32 1, %s6
  %s9 = scalar_select 0, %s8, %s6
  $region1: #{mlp3d_pallas_forward.1} parent=0
    #allocation2 [shape = 'u8[65536]{0}', space=vmem, size = 0x10000, scoped, tag = 'input window, operand 1, single buffered']
    #allocation3 [shape = 's32[1]{0}', space=sflag, size = 0x4, scoped, tag = 'scoped memory for mlp3d_pallas_forward.1']
    #allocation4 [shape = 'u8[65536]{0}', space=vmem, size = 0x10000, scoped, tag = 'input window, operand 3, single buffered']
    #allocation5 [shape = 's32[1]{0}', space=sflag, size = 0x4, scoped, tag = 'scoped memory for mlp3d_pallas_forward.1']
    %10 = vsyncpa [#allocation3], 0
    %11 = vsyncpa [#allocation5], 0
    // Predicated region
    $region2: #{mlp3d_pallas_forward.1} parent=1 // pred_check
      _
    $region3: #{mlp3d_pallas_forward.1} parent=1 // pred_check_branch
      %13 = sbr.rel (0) target = $region5
    $region4: #{mlp3d_pallas_forward.1} parent=1 // pred_region
      _
    $region5: #{mlp3d_pallas_forward.1} parent=1 // pred_fallthru
      _
    // Predicated region
    $region6: #{mlp3d_pallas_forward.1} parent=1 // pred_check
      _
    $region7: #{mlp3d_pallas_forward.1} parent=1 // pred_check_branch
      %15 = sbr.rel (0) target = $region9
    $region8: #{mlp3d_pallas_forward.1} parent=1 // pred_region
      %s17 = ssub.s32 2048, 2048
      %18 = vsyncadd [#allocation3], %s17
      %s19 = sshll.u32 [#allocation2], 4
      %s20 = int_to_ptr.vmem [resolvable:$true] %s19
      %25 = dma.hbm_to_vmem [thread:$0]  %s1, 2048, %s20, [#allocation3], 128, 128, 8
    $region9: #{mlp3d_pallas_forward.1} parent=1 // pred_fallthru
      _
    // Predicated region
    $region10: #{mlp3d_pallas_forward.1} parent=1 // pred_check
      _
    $region11: #{mlp3d_pallas_forward.1} parent=1 // pred_check_branch
      %27 = sbr.rel (0) target = $region13
    $region12: #{mlp3d_pallas_forward.1} parent=1 // pred_region
      _
    $region13: #{mlp3d_pallas_forward.1} parent=1 // pred_fallthru
      _
    // Predicated region
    $region14: #{mlp3d_pallas_forward.1} parent=1 // pred_check
      _
    $region15: #{mlp3d_pallas_forward.1} parent=1 // pred_check_branch
      %29 = sbr.rel (0) target = $region17
    $region16: #{mlp3d_pallas_forward.1} parent=1 // pred_region
      %s31 = ssub.s32 2048, 2048
      %32 = vsyncadd [#allocation5], %s31
      %s33 = sshll.u32 [#allocation4], 4
      %s34 = int_to_ptr.vmem [resolvable:$true] %s33
      %39 = dma.hbm_to_vmem [thread:$0]  %s3, 2048, %s34, [#allocation5], 128, 128, 8
    $region17: #{mlp3d_pallas_forward.1} parent=1 // pred_fallthru
      _
    // Predicated region
    $region18: #{mlp3d_pallas_forward.1} parent=1 // pred_check
      _
    $region19: #{mlp3d_pallas_forward.1} parent=1 // pred_check_branch
      %41 = sbr.rel (0) target = $region21
    $region20: #{mlp3d_pallas_forward.1} parent=1 // pred_region
      _
    $region21: #{mlp3d_pallas_forward.1} parent=1 // pred_fallthru
      _
    // Predicated region
    $region22: #{mlp3d_pallas_forward.1} parent=1 // pred_check
      _
    $region23: #{mlp3d_pallas_forward.1} parent=1 // pred_check_branch
      %43 = sbr.rel (0) target = $region25
    $region24: #{mlp3d_pallas_forward.1} parent=1 // pred_region
      %44 = dma.done [#allocation3], 2048
    $region25: #{mlp3d_pallas_forward.1} parent=1 // pred_fallthru
      _
    // Predicated region
    $region26: #{mlp3d_pallas_forward.1} parent=1 // pred_check
      _
    $region27: #{mlp3d_pallas_forward.1} parent=1 // pred_check_branch
      %46 = sbr.rel (0) target = $region29
    $region28: #{mlp3d_pallas_forward.1} parent=1 // pred_region
      %47 = dma.done [#allocation5], 2048
    $region29: #{mlp3d_pallas_forward.1} parent=1 // pred_fallthru
      _
    %v48 = vld [vmem:[%s0] sm:$0xff]
    %v49 = vld [vmem:[%s0 + $0x8] sm:$0xff]
    %v50 = vld [vmem:[#allocation2] sm:$0xff]
    %v51 = vld [vmem:[#allocation2 + $0x8] sm:$0xff]
    %v52 = vld [vmem:[#allocation2 + $0x10] sm:$0xff]
    %v53 = vld [vmem:[#allocation2 + $0x18] sm:$0xff]
    %v54 = vld [vmem:[#allocation2 + $0x20] sm:$0xff]
    %v55 = vld [vmem:[#allocation2 + $0x28] sm:$0xff]
    %v56 = vld [vmem:[#allocation2 + $0x30] sm:$0xff]
    %v57 = vld [vmem:[#allocation2 + $0x38] sm:$0xff]
    %v58 = vld [vmem:[#allocation2 + $0x40] sm:$0xff]
    %v59 = vld [vmem:[#allocation2 + $0x48] sm:$0xff]
    %v60 = vld [vmem:[#allocation2 + $0x50] sm:$0xff]
    %v61 = vld [vmem:[#allocation2 + $0x58] sm:$0xff]
    %v62 = vld [vmem:[#allocation2 + $0x60] sm:$0xff]
    %v63 = vld [vmem:[#allocation2 + $0x68] sm:$0xff]
    %v64 = vld [vmem:[#allocation2 + $0x70] sm:$0xff]
    %v65 = vld [vmem:[#allocation2 + $0x78] sm:$0xff]
    %v66 = vld [vmem:[%s2] sm:$0x1]
    %v68 = vlaneseq
    %v69 = vshrl.u32 %v68, 7
    %v70 = vsub.s32 0, %v69
    %v71 = vrot.slane %v66, %v70
    %73 = vmatprep.subr.mxu0 0.0
    %74 = vmatpush1.msra.mxu0 %v50
    %75 = vmatprep.subr.mxu0 0.0
    %76 = vmatpush1.msra.mxu0 %v51
    %77 = vmatprep.subr.mxu0 0.0
    %78 = vmatpush1.msra.mxu0 %v52
    %79 = vmatprep.subr.mxu0 0.0
    %80 = vmatpush1.msra.mxu0 %v53
    %81 = vmatprep.subr.mxu0 0.0
    %82 = vmatpush1.msra.mxu0 %v54
    %83 = vmatprep.subr.mxu0 0.0
    %84 = vmatpush1.msra.mxu0 %v55
    %85 = vmatprep.subr.mxu0 0.0
    %86 = vmatpush1.msra.mxu0 %v56
    %87 = vmatprep.subr.mxu0 0.0
    %88 = vmatpush1.msra.mxu0 %v57
    %89 = vmatprep.subr.mxu0 0.0
    %90 = vmatpush1.msra.mxu0 %v58
    %91 = vmatprep.subr.mxu0 0.0
    %92 = vmatpush1.msra.mxu0 %v59
    %93 = vmatprep.subr.mxu0 0.0
    %94 = vmatpush1.msra.mxu0 %v60
    %95 = vmatprep.subr.mxu0 0.0
    %96 = vmatpush1.msra.mxu0 %v61
    %97 = vmatprep.subr.mxu0 0.0
    %98 = vmatpush1.msra.mxu0 %v62
    %99 = vmatprep.subr.mxu0 0.0
    %100 = vmatpush1.msra.mxu0 %v63
    %101 = vmatprep.subr.mxu0 0.0
    %102 = vmatpush1.msra.mxu0 %v64
    %103 = vmatprep.subr.mxu0 0.0
    %104 = vmatpush1.msra.mxu0 %v65
    %105 = vmatprep.subr.mxu0 0.0
    %106 = vmatpush1.msra.mxu0 0.0
    %107 = vmatprep.subr.mxu0 0.0
    %108 = vmatpush1.msra.mxu0 0.0
    %109 = vmatprep.subr.mxu0 0.0
    %110 = vmatpush1.msra.mxu0 0.0
    %111 = vmatprep.subr.mxu0 0.0
    %112 = vmatpush1.msra.mxu0 0.0
    %113 = vmatprep.subr.mxu0 0.0
    %114 = vmatpush1.msra.mxu0 0.0
    %115 = vmatprep.subr.mxu0 0.0
    %116 = vmatpush1.msra.mxu0 0.0
    %117 = vmatprep.subr.mxu0 0.0
    %118 = vmatpush1.msra.mxu0 0.0
    %119 = vmatprep.subr.mxu0 0.0
    %120 = vmatpush1.msra.mxu0 0.0
    %121 = vmatprep.subr.mxu0 0.0
    %122 = vmatpush1.msra.mxu0 0.0
    %123 = vmatprep.subr.mxu0 0.0
    %124 = vmatpush1.msra.mxu0 0.0
    %125 = vmatprep.subr.mxu0 0.0
    %126 = vmatpush1.msra.mxu0 0.0
    %127 = vmatprep.subr.mxu0 0.0
    %128 = vmatpush1.msra.mxu0 0.0
    %129 = vmatprep.subr.mxu0 0.0
    %130 = vmatpush1.msra.mxu0 0.0
    %131 = vmatprep.subr.mxu0 0.0
    %132 = vmatpush1.msra.mxu0 0.0
    %133 = vmatprep.subr.mxu0 0.0
    %134 = vmatpush1.msra.mxu0 0.0
    %135 = vmatprep.subr.mxu0 0.0
    %136 = vmatpush1.msra.mxu0 0.0
    %137 = vmatprep.mubr.f32.mxu0 0.0
    %138 = vmatmul.mubr.f32.gmra.mrb[0].mxu0 %v48
    %v139 = vpop.f32.mrb[0].mxu0
    %v140 = vadd.f32 %v71, %v139
    %v141 = vpop.f32.mrb[0].mxu0
    %142 = vmatprep.mubr.f32.mxu0 0.0
    %143 = vmatmul.mubr.f32.gmra.mrb[0].mxu0 %v49
    %v144 = vpop.f32.mrb[0].mxu0
    %v145 = vadd.f32 %v71, %v144
    %v146 = vpop.f32.mrb[0].mxu0
    %147 = vdwg.mxu0
    %v148 = vmul.f32 %v140, 0.5
    %v149 = vmul.f32 %v145, 0.5
    %v150 = vmul.f32 %v140, 0.70710677
    %v151 = vmul.f32 %v145, 0.70710677
    %v152 = verf.f32.pop %v150
    %v153 = verf.f32.pop %v151
    %v154 = vadd.f32 %v152, 1.0
    %v155 = vadd.f32 %v153, 1.0
    %v156 = vmul.f32 %v148, %v154
    %v157 = vmul.f32 %v149, %v155
    %v158 = vld [vmem:[#allocation4] sm:$0xff]
    %v159 = vld [vmem:[#allocation4 + $0x8] sm:$0xff]
    %v160 = vld [vmem:[#allocation4 + $0x10] sm:$0xff]
    %v161 = vld [vmem:[#allocation4 + $0x18] sm:$0xff]
    %v162 = vld [vmem:[#allocation4 + $0x20] sm:$0xff]
    %v163 = vld [vmem:[#allocation4 + $0x28] sm:$0xff]
    %v164 = vld [vmem:[#allocation4 + $0x30] sm:$0xff]
    %v165 = vld [vmem:[#allocation4 + $0x38] sm:$0xff]
    %v166 = vld [vmem:[#allocation4 + $0x40] sm:$0xff]
    %v167 = vld [vmem:[#allocation4 + $0x48] sm:$0xff]
    %v168 = vld [vmem:[#allocation4 + $0x50] sm:$0xff]
    %v169 = vld [vmem:[#allocation4 + $0x58] sm:$0xff]
    %v170 = vld [vmem:[#allocation4 + $0x60] sm:$0xff]
    %v171 = vld [vmem:[#allocation4 + $0x68] sm:$0xff]
    %v172 = vld [vmem:[#allocation4 + $0x70] sm:$0xff]
    %v173 = vld [vmem:[#allocation4 + $0x78] sm:$0xff]
    %v174 = vld [vmem:[%s4] sm:$0x1]
    %v176 = vlaneseq
    %v177 = vshrl.u32 %v176, 7
    %v178 = vsub.s32 0, %v177
    %v179 = vrot.slane %v174, %v178
    %181 = vmatprep.subr.mxu0 0.0
    %182 = vmatpush1.msra.mxu0 %v158
    %183 = vmatprep.subr.mxu0 0.0
    %184 = vmatpush1.msra.mxu0 %v159
    %185 = vmatprep.subr.mxu0 0.0
    %186 = vmatpush1.msra.mxu0 %v160
    %187 = vmatprep.subr.mxu0 0.0
    %188 = vmatpush1.msra.mxu0 %v161
    %189 = vmatprep.subr.mxu0 0.0
    %190 = vmatpush1.msra.mxu0 %v162
    %191 = vmatprep.subr.mxu0 0.0
    %192 = vmatpush1.msra.mxu0 %v163
    %193 = vmatprep.subr.mxu0 0.0
    %194 = vmatpush1.msra.mxu0 %v164
    %195 = vmatprep.subr.mxu0 0.0
    %196 = vmatpush1.msra.mxu0 %v165
    %197 = vmatprep.subr.mxu0 0.0
    %198 = vmatpush1.msra.mxu0 %v166
    %199 = vmatprep.subr.mxu0 0.0
    %200 = vmatpush1.msra.mxu0 %v167
    %201 = vmatprep.subr.mxu0 0.0
    %202 = vmatpush1.msra.mxu0 %v168
    %203 = vmatprep.subr.mxu0 0.0
    %204 = vmatpush1.msra.mxu0 %v169
    %205 = vmatprep.subr.mxu0 0.0
    %206 = vmatpush1.msra.mxu0 %v170
    %207 = vmatprep.subr.mxu0 0.0
    %208 = vmatpush1.msra.mxu0 %v171
    %209 = vmatprep.subr.mxu0 0.0
    %210 = vmatpush1.msra.mxu0 %v172
    %211 = vmatprep.subr.mxu0 0.0
    %212 = vmatpush1.msra.mxu0 %v173
    %213 = vmatprep.subr.mxu0 0.0
    %214 = vmatpush1.msra.mxu0 0.0
    %215 = vmatprep.subr.mxu0 0.0
    %216 = vmatpush1.msra.mxu0 0.0
    %217 = vmatprep.subr.mxu0 0.0
    %218 = vmatpush1.msra.mxu0 0.0
    %219 = vmatprep.subr.mxu0 0.0
    %220 = vmatpush1.msra.mxu0 0.0
    %221 = vmatprep.subr.mxu0 0.0
    %222 = vmatpush1.msra.mxu0 0.0
    %223 = vmatprep.subr.mxu0 0.0
    %224 = vmatpush1.msra.mxu0 0.0
    %225 = vmatprep.subr.mxu0 0.0
    %226 = vmatpush1.msra.mxu0 0.0
    %227 = vmatprep.subr.mxu0 0.0
    %228 = vmatpush1.msra.mxu0 0.0
    %229 = vmatprep.subr.mxu0 0.0
    %230 = vmatpush1.msra.mxu0 0.0
    %231 = vmatprep.subr.mxu0 0.0
    %232 = vmatpush1.msra.mxu0 0.0
    %233 = vmatprep.subr.mxu0 0.0
    %234 = vmatpush1.msra.mxu0 0.0
    %235 = vmatprep.subr.mxu0 0.0
    %236 = vmatpush1.msra.mxu0 0.0
    %237 = vmatprep.subr.mxu0 0.0
    %238 = vmatpush1.msra.mxu0 0.0
    %239 = vmatprep.subr.mxu0 0.0
    %240 = vmatpush1.msra.mxu0 0.0
    %241 = vmatprep.subr.mxu0 0.0
    %242 = vmatpush1.msra.mxu0 0.0
    %243 = vmatprep.subr.mxu0 0.0
    %244 = vmatpush1.msra.mxu0 0.0
    %245 = vmatprep.mubr.f32.mxu0 0.0
    %246 = vmatmul.mubr.f32.gmra.mrb[0].mxu0 %v156
    %v247 = vpop.f32.mrb[0].mxu0
    %v248 = vadd.f32 %v179, %v247
    %v249 = vpop.f32.mrb[0].mxu0
    %250 = vmatprep.mubr.f32.mxu0 0.0
    %251 = vmatmul.mubr.f32.gmra.mrb[0].mxu0 %v157
    %v252 = vpop.f32.mrb[0].mxu0
    %v253 = vadd.f32 %v179, %v252
    %v254 = vpop.f32.mrb[0].mxu0
    %255 = vdwg.mxu0
    %256 = vst [vmem:[%s5] sm:$0xff] %v248
    %257 = vst [vmem:[%s5 + $0x8] sm:$0xff] %v253
    // Predicated region
    $region30: #{mlp3d_pallas_forward.1} parent=1 // pred_check
      _
    $region31: #{mlp3d_pallas_forward.1} parent=1 // pred_check_branch
      %259 = sbr.rel (0) target = $region33
    $region32: #{mlp3d_pallas_forward.1} parent=1 // pred_region
      _
    $region33: #{mlp3d_pallas_forward.1} parent=1 // pred_fallthru
      _
    // Predicated region
    $region34: #{mlp3d_pallas_forward.1} parent=1 // pred_check
      _
    $region35: #{mlp3d_pallas_forward.1} parent=1 // pred_check_branch
      %261 = sbr.rel (0) target = $region37
    $region36: #{mlp3d_pallas_forward.1} parent=1 // pred_region
      _
    $region37: #{mlp3d_pallas_forward.1} parent=1 // pred_fallthru
      _
    %262 = vsyncpa [#allocation3], 1
    %263 = vsyncpa [#allocation5], 1

</llo_original>
